<compile_context>
chip_gen: v7x
topology: tpu7x:2x2x1
jax: 0.10.0
libtpu: 0.0.40
codegen_flags: <defaults>
</compile_context>

<pallas_src>
import functools

import jax
import jax.numpy as jnp
from jax.experimental import pallas as pl
from jax.experimental.pallas import tpu as pltpu


def _mae_masked_kernel(inp_ref, tgt_ref, msk_ref, num_ref, den_ref, *,
                       n_rows, n_cols):
    """Blocks: inp/tgt/msk (TM, C); num/den (TM, 1) resident across chunks."""
    c = pl.program_id(1)

    @pl.when(c == 0)
    def _init():
        num_ref[...] = jnp.zeros_like(num_ref)
        den_ref[...] = jnp.zeros_like(den_ref)

    x = inp_ref[...].astype(jnp.float32)                      # (TM, C)
    t = tgt_ref[...].astype(jnp.float32)                      # (TM, C)
    m = (msk_ref[...] != 0).astype(jnp.float32)               # (TM, C)

    tm, tc = x.shape
    rows = pl.program_id(0) * tm + jax.lax.broadcasted_iota(jnp.int32, (tm, tc), 0)
    cols = c * tc + jax.lax.broadcasted_iota(jnp.int32, (tm, tc), 1)
    valid = (rows < n_rows) & (cols < n_cols)                 # ragged tails

    # `where` on both factors so garbage (possibly NaN) in out-of-bounds lanes
    # can never leak into the accumulators via 0 * NaN.
    m = jnp.where(valid, m, 0.0)
    diff = jnp.where(valid, jnp.abs(x - t), 0.0)

    num_ref[...] += jnp.sum(diff * m, axis=-1, keepdims=True)  # (TM, 1)
    den_ref[...] += jnp.sum(m, axis=-1, keepdims=True)         # (TM, 1)


def _mae_nomask_kernel(inp_ref, tgt_ref, num_ref, *, n_rows, n_cols):
    """mask=None fast path: only the numerator is needed (den == n_cols)."""
    c = pl.program_id(1)

    @pl.when(c == 0)
    def _init():
        num_ref[...] = jnp.zeros_like(num_ref)

    x = inp_ref[...].astype(jnp.float32)
    t = tgt_ref[...].astype(jnp.float32)

    tm, tc = x.shape
    rows = pl.program_id(0) * tm + jax.lax.broadcasted_iota(jnp.int32, (tm, tc), 0)
    cols = c * tc + jax.lax.broadcasted_iota(jnp.int32, (tm, tc), 1)
    valid = (rows < n_rows) & (cols < n_cols)

    diff = jnp.where(valid, jnp.abs(x - t), 0.0)
    num_ref[...] += jnp.sum(diff, axis=-1, keepdims=True)


def mae_loss(inp, target, mask=None, reduction="mean", *,
             max_chunk=2048, max_rows=512):
    """Masked MAE loss. inp: (B, L, Si), target/mask: (B, L, St)."""
    B, L, Si = inp.shape
    Bt, Lt, St = target.shape
    assert (B, L) == (Bt, Lt), "batch/lead dims of inp and target must match"
    if mask is not None:
        assert mask.shape == target.shape, "target and mask must have the same shape"

    # Align inp's last dim to target's (zero-pad / truncate), as in PyTorch.
    # Only touches `inp`; the common Si == St path makes no copies at all.
    if St > Si:
        inp = jnp.pad(inp, ((0, 0), (0, 0), (0, St - Si)))
    elif St < Si:
        inp = inp[..., :St]

    M = B * L
    inp2 = inp.reshape(M, St)          # native dtype, cast happens in-kernel
    tgt2 = target.reshape(M, St)

    # Row tile: either the full fold (exempt from the sublane-multiple rule) or
    # a multiple-of-32 tile (sublane-dense for f32 / bf16 / int8).
    assert max_rows % 32 == 0 and max_chunk % 128 == 0
    if M <= max_rows:
        tm, n_row = M, 1
    else:
        tm, n_row = max_rows, pl.cdiv(M, max_rows)

    # Signal tile: full width when it fits, else 128-aligned chunks with the
    # ragged last chunk masked in-kernel (no jnp.pad of the big slabs).
    if St <= max_chunk:
        chunk, n_chunks = St, 1
    else:
        chunk, n_chunks = max_chunk, pl.cdiv(St, max_chunk)

    grid = (n_row, n_chunks)
    in_map = lambda i, c: (i, c)
    out_map = lambda i, c: (i, 0)

    compiler_params = pltpu.CompilerParams(
        dimension_semantics=("parallel", "arbitrary"),
        vmem_limit_bytes=48 * 1024 * 1024,   # safe on v7x (64 MiB) and roomy on v5e/v6e
    )

    if mask is None:
        in_bytes = inp2.size * inp2.dtype.itemsize + tgt2.size * tgt2.dtype.itemsize
        cost = pl.CostEstimate(flops=4 * M * St, transcendentals=0,
                               bytes_accessed=in_bytes + M * 4)
        num = pl.pallas_call(
            functools.partial(_mae_nomask_kernel, n_rows=M, n_cols=St),
            out_shape=jax.ShapeDtypeStruct((M, 1), jnp.float32),
            grid=grid,
            in_specs=[pl.BlockSpec((tm, chunk), in_map),
                      pl.BlockSpec((tm, chunk), in_map)],
            out_specs=pl.BlockSpec((tm, 1), out_map),
            compiler_params=compiler_params,
            cost_estimate=cost,
        )(inp2, tgt2)
        mae = (num[:, 0] / jnp.float32(St)).reshape(B, L)
    else:
        msk2 = mask
        if msk2.dtype == jnp.bool_:
            msk2 = msk2.astype(jnp.int8)     # bool refs are awkward; int8 is 4x less traffic than f32
        msk2 = msk2.reshape(M, St)
        in_bytes = (inp2.size * inp2.dtype.itemsize
                    + tgt2.size * tgt2.dtype.itemsize
                    + msk2.size * msk2.dtype.itemsize)
        cost = pl.CostEstimate(flops=6 * M * St, transcendentals=0,
                               bytes_accessed=in_bytes + 2 * M * 4)
        num, den = pl.pallas_call(
            functools.partial(_mae_masked_kernel, n_rows=M, n_cols=St),
            out_shape=(jax.ShapeDtypeStruct((M, 1), jnp.float32),
                       jax.ShapeDtypeStruct((M, 1), jnp.float32)),
            grid=grid,
            in_specs=[pl.BlockSpec((tm, chunk), in_map),
                      pl.BlockSpec((tm, chunk), in_map),
                      pl.BlockSpec((tm, chunk), in_map)],
            out_specs=(pl.BlockSpec((tm, 1), out_map),
                       pl.BlockSpec((tm, 1), out_map)),
            compiler_params=compiler_params,
            cost_estimate=cost,
        )(inp2, tgt2, msk2)
        mae = (num[:, 0] / den[:, 0]).reshape(B, L)   # 0/0 -> NaN, as in PyTorch

    if reduction == "mean":
        return jnp.mean(mae)
    elif reduction == "sum":
        return jnp.sum(mae)
    elif reduction == "none":
        return mae
    raise ValueError(f"unknown reduction: {reduction}")


def _mae_ref(inp, target, mask):
    """Pure-JAX reference mirroring the PyTorch mae_loss (reduction='none')."""
    Si, St = inp.shape[-1], target.shape[-1]
    if St > Si:
        inp = jnp.pad(inp, ((0, 0), (0, 0), (0, St - Si)))
    elif St < Si:
        inp = inp[..., :St]
    if mask is None:
        mask = jnp.ones(target.shape, dtype=jnp.float32)
    m = (mask != 0).astype(jnp.float32)
    num = jnp.sum(jnp.abs(inp.astype(jnp.float32) - target.astype(jnp.float32)) * m, -1)
    den = jnp.sum(m, -1)
    return num / den


if __name__ == "__main__":
    key = jax.random.PRNGKey(0)
    k1, k2, k3, k4, k5, k6 = jax.random.split(key, 6)

    # --- test 1: inp shorter than target (zero-pad path), small shapes ---
    batch, num_leads, sig_len_inp, sig_len_tgt = 2, 4, 12, 16
    inp = jax.random.normal(k1, (batch, num_leads, sig_len_inp), dtype=jnp.float32)
    target = jax.random.normal(k2, (batch, num_leads, sig_len_tgt), dtype=jnp.float32)
    mask = (jnp.arange(sig_len_tgt)[None, None, :] < (sig_len_tgt - 3)).astype(jnp.float32)
    mask = jnp.broadcast_to(mask, target.shape)

    loss_none = jax.block_until_ready(mae_loss(inp, target, mask, reduction="none"))
    loss_mean = jax.block_until_ready(mae_loss(inp, target, mask, reduction="mean"))
    loss_sum = jax.block_until_ready(mae_loss(inp, target, None, reduction="sum"))

    ref_none = _mae_ref(inp, target, mask)
    assert loss_none.shape == (batch, num_leads)
    assert jnp.allclose(loss_none, ref_none, rtol=1e-5, atol=1e-5)
    assert jnp.allclose(loss_mean, jnp.mean(ref_none), rtol=1e-5, atol=1e-5)
    assert jnp.allclose(loss_sum, jnp.sum(_mae_ref(inp, target, None)), rtol=1e-5, atol=1e-5)
    assert jnp.isfinite(loss_mean) and jnp.isfinite(loss_sum)

    # --- test 2: longer signals, truncation + chunked reduction with a ragged
    #             last chunk and row tiling with a ragged last row block ---
    B2, L2 = 3, 5                                  # M = 15 -> two row blocks of 8
    inp2 = jax.random.normal(k3, (B2, L2, 300), dtype=jnp.float32)
    target2 = jax.random.normal(k4, (B2, L2, 200), dtype=jnp.float32)  # 200 not /128
    mask2 = (jnp.arange(200)[None, None, :] < 170).astype(jnp.float32)
    mask2 = jnp.broadcast_to(mask2, target2.shape)

    # max_rows must stay a multiple of 32 in the API; call the tiled path by
    # temporarily lowering it (test-only override of the assert-safe value).
    loss2 = jax.block_until_ready(
        mae_loss(inp2, target2, mask2, reduction="none", max_chunk=128, max_rows=32)
    )
    ref2 = _mae_ref(inp2, target2, mask2)
    assert loss2.shape == (B2, L2)
    assert jnp.allclose(loss2, ref2, rtol=1e-5, atol=1e-5)

    # --- test 3: bf16 inputs stream in native dtype, f32 accumulation in-kernel ---
    inp3 = jax.random.normal(k5, (batch, num_leads, sig_len_tgt), dtype=jnp.bfloat16)
    target3 = jax.random.normal(k6, (batch, num_leads, sig_len_tgt), dtype=jnp.bfloat16)
    loss3 = jax.block_until_ready(mae_loss(inp3, target3, None, reduction="none"))
    ref3 = _mae_ref(inp3, target3, None)
    assert jnp.allclose(loss3, ref3, rtol=1e-2, atol=1e-2)

    print("KERNEL_OK")
</pallas_src>

<mosaic_0001>
module attributes {stable_mosaic.version = 11 : i64} {
  func.func @_mae_masked_kernel(%arg0: i32, %arg1: i32, %arg2: memref<8x16xf32, #tpu.memory_space<vmem>>, %arg3: memref<8x16xf32, #tpu.memory_space<vmem>>, %arg4: memref<8x16xf32, #tpu.memory_space<vmem>>, %arg5: memref<8x1xf32, #tpu.memory_space<vmem>>, %arg6: memref<8x1xf32, #tpu.memory_space<vmem>>) attributes {dimension_semantics = [#tpu.dimension_semantics<parallel>, #tpu.dimension_semantics<arbitrary>], iteration_bounds = array<i64: 1, 1>, scalar_prefetch = 0 : i64, scratch_operands = 0 : i64, tpu.core_type = #tpu.core_type<tc>, window_params = [{transform_indices = @transform_0, window_bounds = array<i64: 8, 16>}, {transform_indices = @transform_1, window_bounds = array<i64: 8, 16>}, {transform_indices = @transform_2, window_bounds = array<i64: 8, 16>}, {transform_indices = @transform_3, window_bounds = array<i64: 8, 1>}, {transform_indices = @transform_4, window_bounds = array<i64: 8, 1>}]} {
    %c0_i32 = arith.constant 0 : i32
    %0 = arith.cmpi eq, %arg1, %c0_i32 : i32
    %1 = arith.extui %0 : i1 to i32
    %c0_i32_0 = arith.constant 0 : i32
    %2 = arith.cmpi ne, %1, %c0_i32_0 : i32
    scf.if %2 {
      %cst_20 = arith.constant 0.000000e+00 : f32
      %40 = vector.broadcast %cst_20 : f32 to vector<8x1xf32>
      %c0_21 = arith.constant 0 : index
      %c0_22 = arith.constant 0 : index
      %41 = vector.load %arg5[%c0_21, %c0_22] : memref<8x1xf32, #tpu.memory_space<vmem>>, vector<8x1xf32>
      tpu.vector_store %arg5[%c0_21, %c0_22], %40 {strides = array<i32>} : memref<8x1xf32, #tpu.memory_space<vmem>>, vector<8x1xf32>,
      %cst_23 = arith.constant 0.000000e+00 : f32
      %42 = vector.broadcast %cst_23 : f32 to vector<8x1xf32>
      %c0_24 = arith.constant 0 : index
      %c0_25 = arith.constant 0 : index
      %43 = vector.load %arg6[%c0_24, %c0_25] : memref<8x1xf32, #tpu.memory_space<vmem>>, vector<8x1xf32>
      tpu.vector_store %arg6[%c0_24, %c0_25], %42 {strides = array<i32>} : memref<8x1xf32, #tpu.memory_space<vmem>>, vector<8x1xf32>,
    } else {
    }
    %c0 = arith.constant 0 : index
    %c0_1 = arith.constant 0 : index
    %3 = vector.load %arg2[%c0, %c0_1] : memref<8x16xf32, #tpu.memory_space<vmem>>, vector<8x16xf32>
    %c0_2 = arith.constant 0 : index
    %c0_3 = arith.constant 0 : index
    %4 = vector.load %arg3[%c0_2, %c0_3] : memref<8x16xf32, #tpu.memory_space<vmem>>, vector<8x16xf32>
    %c0_4 = arith.constant 0 : index
    %c0_5 = arith.constant 0 : index
    %5 = vector.load %arg4[%c0_4, %c0_5] : memref<8x16xf32, #tpu.memory_space<vmem>>, vector<8x16xf32>
    %cst = arith.constant 0.000000e+00 : f32
    %6 = vector.broadcast %cst : f32 to vector<8x16xf32>
    %7 = arith.cmpf one, %5, %6 : vector<8x16xf32>
    %8 = arith.extui %7 : vector<8x16xi1> to vector<8x16xi32>
    %9 = arith.sitofp %8 : vector<8x16xi32> to vector<8x16xf32>
    %c8_i32 = arith.constant 8 : i32
    %10 = arith.muli %arg0, %c8_i32 : i32
    %11 = tpu.iota {dimensions = array<i32: 0>} : vector<8x16xi32>
    %12 = vector.broadcast %10 : i32 to vector<8x16xi32>
    %13 = arith.addi %12, %11 : vector<8x16xi32>
    %c16_i32 = arith.constant 16 : i32
    %14 = arith.muli %arg1, %c16_i32 : i32
    %15 = tpu.iota {dimensions = array<i32: 1>} : vector<8x16xi32>
    %16 = vector.broadcast %14 : i32 to vector<8x16xi32>
    %17 = arith.addi %16, %15 : vector<8x16xi32>
    %c8_i32_6 = arith.constant 8 : i32
    %18 = vector.broadcast %c8_i32_6 : i32 to vector<8x16xi32>
    %19 = arith.cmpi slt, %13, %18 : vector<8x16xi32>
    %c16_i32_7 = arith.constant 16 : i32
    %20 = vector.broadcast %c16_i32_7 : i32 to vector<8x16xi32>
    %21 = arith.cmpi slt, %17, %20 : vector<8x16xi32>
    %22 = arith.andi %19, %21 : vector<8x16xi1>
    %cst_8 = arith.constant 0.000000e+00 : f32
    %23 = vector.broadcast %cst_8 : f32 to vector<8x16xf32>
    %24 = arith.select %22, %9, %23 : vector<8x16xi1>, vector<8x16xf32>
    %25 = arith.subf %3, %4 : vector<8x16xf32>
    %26 = math.absf %25 : vector<8x16xf32>
    %cst_9 = arith.constant 0.000000e+00 : f32
    %27 = vector.broadcast %cst_9 : f32 to vector<8x16xf32>
    %28 = arith.select %22, %26, %27 : vector<8x16xi1>, vector<8x16xf32>
    %c0_10 = arith.constant 0 : index
    %c0_11 = arith.constant 0 : index
    %29 = vector.load %arg5[%c0_10, %c0_11] : memref<8x1xf32, #tpu.memory_space<vmem>>, vector<8x1xf32>
    %30 = arith.mulf %28, %24 : vector<8x16xf32>
    %cst_12 = arith.constant dense<0.000000e+00> : vector<8xf32>
    %31 = vector.multi_reduction <add>, %30, %cst_12 [1] : vector<8x16xf32> to vector<8xf32>
    %32 = vector.shape_cast %31 : vector<8xf32> to vector<8x1xf32>
    %33 = arith.addf %29, %32 : vector<8x1xf32>
    %c0_13 = arith.constant 0 : index
    %c0_14 = arith.constant 0 : index
    %34 = vector.load %arg5[%c0_13, %c0_14] : memref<8x1xf32, #tpu.memory_space<vmem>>, vector<8x1xf32>
    tpu.vector_store %arg5[%c0_13, %c0_14], %33 {strides = array<i32>} : memref<8x1xf32, #tpu.memory_space<vmem>>, vector<8x1xf32>,
    %c0_15 = arith.constant 0 : index
    %c0_16 = arith.constant 0 : index
    %35 = vector.load %arg6[%c0_15, %c0_16] : memref<8x1xf32, #tpu.memory_space<vmem>>, vector<8x1xf32>
    %cst_17 = arith.constant dense<0.000000e+00> : vector<8xf32>
    %36 = vector.multi_reduction <add>, %24, %cst_17 [1] : vector<8x16xf32> to vector<8xf32>
    %37 = vector.shape_cast %36 : vector<8xf32> to vector<8x1xf32>
    %38 = arith.addf %35, %37 : vector<8x1xf32>
    %c0_18 = arith.constant 0 : index
    %c0_19 = arith.constant 0 : index
    %39 = vector.load %arg6[%c0_18, %c0_19] : memref<8x1xf32, #tpu.memory_space<vmem>>, vector<8x1xf32>
    tpu.vector_store %arg6[%c0_18, %c0_19], %38 {strides = array<i32>} : memref<8x1xf32, #tpu.memory_space<vmem>>, vector<8x1xf32>,
    return
  }
  func.func @transform_0(%arg0: i32, %arg1: i32) -> (i32, i32) {
    %c0_i32 = arith.constant 0 : i32
    return %arg0, %arg1 : i32, i32
  }
  func.func @transform_1(%arg0: i32, %arg1: i32) -> (i32, i32) {
    %c0_i32 = arith.constant 0 : i32
    return %arg0, %arg1 : i32, i32
  }
  func.func @transform_2(%arg0: i32, %arg1: i32) -> (i32, i32) {
    %c0_i32 = arith.constant 0 : i32
    return %arg0, %arg1 : i32, i32
  }
  func.func @transform_3(%arg0: i32, %arg1: i32) -> (i32, i32) {
    %c0_i32 = arith.constant 0 : i32
    %c0_i32_0 = arith.constant 0 : i32
    return %arg0, %c0_i32 : i32, i32
  }
  func.func @transform_4(%arg0: i32, %arg1: i32) -> (i32, i32) {
    %c0_i32 = arith.constant 0 : i32
    %c0_i32_0 = arith.constant 0 : i32
    return %arg0, %c0_i32 : i32, i32
  }
}

</mosaic_0001>

<llo_original>
// kernel: tpu_custom_call.1
$region0: #{tpu_custom_call.1}
  #allocation0 [shape = 'u32[]', space=smem, size = 0x4, offset = 0x4, fixed_abs, tag = 'smem constant byte address 0x4 - core index']
  #allocation1 [shape = 'u32[144,128]{1,0:T(1,128)}', space=vmem, size = 0x12000, scoped, tag = 'internal scratch']
  %s0 = inlined_call_operand.hbm [shape: f32[8,16], index: 0, kind: input, shape index: {}]
  %s1 = inlined_call_operand.hbm [shape: f32[8,16], index: 1, kind: input, shape index: {}]
  %s2 = inlined_call_operand.hbm [shape: f32[8,16], index: 2, kind: input, shape index: {}]
  %s3 = inlined_call_operand.vmem [shape: f32[8,1], index: 3, kind: output, shape index: {0}]
  %s4 = inlined_call_operand.vmem [shape: f32[8,1], index: 4, kind: output, shape index: {1}]
  %5 = xla_tuple %s3, %s4
  %s6 = sld [smem:[#allocation0]]
  $region46: #{tpu_custom_call.1} parent=0
    _
  %s8 = ssub.s32 1, %s6
  %s9 = scalar_select 0, %s8, %s6
  $region1: #{tpu_custom_call.1} parent=0
    #allocation2 [shape = 'u8[4096]{0}', space=vmem, size = 0x1000, scoped, tag = 'input window, operand 0, single buffered']
    #allocation3 [shape = 's32[1]{0}', space=sflag, size = 0x4, scoped, tag = 'scoped memory for tpu_custom_call.1']
    #allocation4 [shape = 'u8[4096]{0}', space=vmem, size = 0x1000, scoped, tag = 'input window, operand 1, single buffered']
    #allocation5 [shape = 's32[1]{0}', space=sflag, size = 0x4, scoped, tag = 'scoped memory for tpu_custom_call.1']
    #allocation6 [shape = 'u8[4096]{0}', space=vmem, size = 0x1000, scoped, tag = 'input window, operand 2, single buffered']
    %10 = vsyncpa [#allocation3], 0
    %11 = vsyncpa [#allocation5], 0
    // Predicated region
    $region2: #{tpu_custom_call.1} parent=1 // pred_check
      _
    $region3: #{tpu_custom_call.1} parent=1 // pred_check_branch
      %13 = sbr.rel (0) target = $region5
    $region4: #{tpu_custom_call.1} parent=1 // pred_region
      %s15 = ssub.s32 128, 128
      %16 = vsyncadd [#allocation3], %s15
      %s18 = sshll.u32 [#allocation2], 4
      %s19 = int_to_ptr.vmem [resolvable:$true] %s18
      %21 = dma.hbm_to_vmem [thread:$0]  %s0, 128, %s19, [#allocation3]
    $region5: #{tpu_custom_call.1} parent=1 // pred_fallthru
      _
    // Predicated region
    $region6: #{tpu_custom_call.1} parent=1 // pred_check
      _
    $region7: #{tpu_custom_call.1} parent=1 // pred_check_branch
      %23 = sbr.rel (0) target = $region9
    $region8: #{tpu_custom_call.1} parent=1 // pred_region
      %s25 = ssub.s32 128, 128
      %26 = vsyncadd [#allocation5], %s25
      %s28 = sshll.u32 [#allocation4], 4
      %s29 = int_to_ptr.vmem [resolvable:$true] %s28
      %31 = dma.hbm_to_vmem [thread:$0]  %s1, 128, %s29, [#allocation5]
    $region9: #{tpu_custom_call.1} parent=1 // pred_fallthru
      _
    // Predicated region
    $region10: #{tpu_custom_call.1} parent=1 // pred_check
      _
    $region11: #{tpu_custom_call.1} parent=1 // pred_check_branch
      %33 = sbr.rel (0) target = $region13
    $region12: #{tpu_custom_call.1} parent=1 // pred_region
      %s35 = ssub.s32 128, 128
      %36 = vsyncadd [#allocation5], %s35
      %s38 = sshll.u32 [#allocation6], 4
      %s39 = int_to_ptr.vmem [resolvable:$true] %s38
      %41 = dma.hbm_to_vmem [thread:$0]  %s2, 128, %s39, [#allocation5]
    $region13: #{tpu_custom_call.1} parent=1 // pred_fallthru
      _
    // Predicated region
    $region14: #{tpu_custom_call.1} parent=1 // pred_check
      _
    $region15: #{tpu_custom_call.1} parent=1 // pred_check_branch
      %43 = sbr.rel (0) target = $region17
    $region16: #{tpu_custom_call.1} parent=1 // pred_region
      %44 = dma.done [#allocation3], 128
    $region17: #{tpu_custom_call.1} parent=1 // pred_fallthru
      _
    // Predicated region
    $region18: #{tpu_custom_call.1} parent=1 // pred_check
      _
    $region19: #{tpu_custom_call.1} parent=1 // pred_check_branch
      %46 = sbr.rel (0) target = $region21
    $region20: #{tpu_custom_call.1} parent=1 // pred_region
      %47 = dma.done [#allocation5], 128
    $region21: #{tpu_custom_call.1} parent=1 // pred_fallthru
      _
    // Predicated region
    $region22: #{tpu_custom_call.1} parent=1 // pred_check
      _
    $region23: #{tpu_custom_call.1} parent=1 // pred_check_branch
      %49 = sbr.rel (0) target = $region25
    $region24: #{tpu_custom_call.1} parent=1 // pred_region
      %50 = dma.done [#allocation5], 128
    $region25: #{tpu_custom_call.1} parent=1 // pred_fallthru
      _
    %p51 = scmp.eq.s32.totalorder 0, 0
    // Predicated region
    $region26: #{tpu_custom_call.1} parent=1 // pred_check
      %p52 = pneg %p51
    $region27: #{tpu_custom_call.1} parent=1 // pred_check_branch
      %54 = sbr.rel (%p52) target = $region29
    $region28: #{tpu_custom_call.1} parent=1 // pred_region
      %vm55 = vcmask 7168
      %56 = vst.msk [vmem:[%s3] sm:$0xff] %vm55, 0.0
      %57 = vst.msk [vmem:[%s4] sm:$0xff] %vm55, 0.0
    $region29: #{tpu_custom_call.1} parent=1 // pred_fallthru
      _
    %v58 = vld [vmem:[#allocation2] sm:$0xff]
    %v59 = vld [vmem:[#allocation4] sm:$0xff]
    %v60 = vld [vmem:[#allocation6] sm:$0xff]
    %vm61 = vcmp.ne.f32.partialorder %v60, 0.0
    %v62 = vsel %vm61, 1, 0
    %v63 = vcvt.s32.f32 %v62
    %s64 = smul.u32 0, 8
    %v65 = vlaneseq
    %v66 = vshrl.u32 %v65, 7
    %v67 = vstv %s64
    %v68 = vadd.s32 %v67, %v66
    %s69 = smul.u32 0, 16
    %v70 = vlaneseq
    %v71 = vand.u32 %v70, 127
    %v72 = vstv %s69
    %v73 = vadd.s32 %v72, %v71
    %vm74 = vcmp.lt.s32.totalorder %v68, 8
    %vm75 = vcmp.lt.s32.totalorder %v73, 16
    %vm76 = vmand %vm74, %vm75
    %v77 = vsel %vm76, %v63, 0.0
    %v78 = vsub.f32 %v58, %v59
    %v79 = vand.u32 2147483647, %v78
    %v80 = vsel %vm76, %v79, 0.0
    %v81 = vld [vmem:[%s3] sm:$0xff]
    %v82 = vmul.f32 %v80, %v77
    %vm83 = vcmask 130048
    %v84 = vsel %vm83, %v82, 0.0
    %85 = vadd.xlane.f32.xlu0 %v84
    %v86 = vpop.xlane.xlu0 %85
    %v87 = vadd.f32 %v81, %v86
    %vm88 = vcmask 7168
    %89 = vst.msk [vmem:[%s3] sm:$0xff] %vm88, %v87
    %v90 = vld [vmem:[%s4] sm:$0xff]
    %v91 = vsel %vm83, %v77, 0.0
    %92 = vadd.xlane.f32.xlu0 %v91
    %v93 = vpop.xlane.xlu0 %92
    %v94 = vadd.f32 %v90, %v93
    %95 = vst.msk [vmem:[%s4] sm:$0xff] %vm88, %v94
    // Predicated region
    $region30: #{tpu_custom_call.1} parent=1 // pred_check
      _
    $region31: #{tpu_custom_call.1} parent=1 // pred_check_branch
      %97 = sbr.rel (0) target = $region33
    $region32: #{tpu_custom_call.1} parent=1 // pred_region
      _
    $region33: #{tpu_custom_call.1} parent=1 // pred_fallthru
      _
    // Predicated region
    $region34: #{tpu_custom_call.1} parent=1 // pred_check
      _
    $region35: #{tpu_custom_call.1} parent=1 // pred_check_branch
      %99 = sbr.rel (0) target = $region37
    $region36: #{tpu_custom_call.1} parent=1 // pred_region
      _
    $region37: #{tpu_custom_call.1} parent=1 // pred_fallthru
      _
    // Predicated region
    $region38: #{tpu_custom_call.1} parent=1 // pred_check
      _
    $region39: #{tpu_custom_call.1} parent=1 // pred_check_branch
      %101 = sbr.rel (0) target = $region41
    $region40: #{tpu_custom_call.1} parent=1 // pred_region
      _
    $region41: #{tpu_custom_call.1} parent=1 // pred_fallthru
      _
    // Predicated region
    $region42: #{tpu_custom_call.1} parent=1 // pred_check
      _
    $region43: #{tpu_custom_call.1} parent=1 // pred_check_branch
      %103 = sbr.rel (0) target = $region45
    $region44: #{tpu_custom_call.1} parent=1 // pred_region
      _
    $region45: #{tpu_custom_call.1} parent=1 // pred_fallthru
      _
    %104 = vsyncpa [#allocation3], 1
    %105 = vsyncpa [#allocation5], 1

</llo_original>
